<compile_context>
chip_gen: v5e
topology: v5e:2x2
jax: 0.10.0
libtpu: 0.0.40
codegen_flags: <defaults>
</compile_context>

<pallas_src>
import math

import jax
import jax.numpy as jnp
from jax.experimental import pallas as pl
from jax.experimental.pallas import tpu as pltpu


def _make_kernel(B, C, HW, hidden):
    inv_n = 1.0 / float(B * C * HW)

    def kernel(sa_ref, soma_ref,          # SMEM (B,) per-batch schedule scalars
               x0_ref, noise_ref,         # VMEM (B, C, HW) f32 slabs (HW lane-dense)
               w1t_ref, w2t_ref,          # VMEM bf16 weights: (hidden, C), (C, hidden)
               bias1_ref,                 # VMEM (B, hidden, 1) f32 (= b1 + time-emb)
               loss_ref):                 # SMEM (1,) f32 output
        acc = jnp.float32(0.0)
        # B is tiny & static -> unrolled; each slab is (C, HW) with HW on lanes.
        for b in range(B):
            sa = sa_ref[b]
            soma = soma_ref[b]
            x0 = x0_ref[b]                # (C, HW) f32
            noise = noise_ref[b]          # (C, HW) f32

            # q-sample on the VPU (f32)
            x_t = sa * x0 + soma * noise

            # time-conditioned channel MLP on the MXU, N = HW lane-dense
            h = jnp.dot(w1t_ref[...], x_t.astype(jnp.bfloat16),
                        preferred_element_type=jnp.float32)          # (hidden, HW)
            h = jnp.maximum(h + bias1_ref[b], 0.0)                   # lane-broadcast bias
            pred = jnp.dot(w2t_ref[...], h.astype(jnp.bfloat16),
                           preferred_element_type=jnp.float32)       # (C, HW)

            err = pred - noise                                       # f32
            acc = acc + jnp.sum(err * err)

        # MSE over all elements. (If HW were tiled, this would become a VMEM
        # accumulator with a pl.when-gated final reduce; unnecessary at one step.)
        loss_ref[0] = acc * inv_n

    return kernel


def make_trainer_state(channels, *, time_steps=1000, beta_1=1e-4, beta_T=0.02,
                       hidden=32, seed=42):
    """One-time setup: diffusion schedule buffers + synthetic model weights."""
    beta = jnp.linspace(beta_1, beta_T, time_steps, dtype=jnp.float32)
    alpha_bar = jnp.cumprod(1.0 - beta)

    kw1, kw2 = jax.random.split(jax.random.PRNGKey(seed))
    w1 = jax.random.normal(kw1, (channels, hidden), jnp.float32) * (1.0 / math.sqrt(channels))
    w2 = jax.random.normal(kw2, (hidden, channels), jnp.float32) * (1.0 / math.sqrt(hidden))

    return {
        "sqrt_alpha_bar": jnp.sqrt(alpha_bar),
        "sqrt_one_minus_alpha_bar": jnp.sqrt(1.0 - alpha_bar),
        # transposed bf16 copies for the kernel's weights^T @ activations matmuls
        "w1t": w1.T.astype(jnp.bfloat16),        # (hidden, C)
        "w2t": w2.T.astype(jnp.bfloat16),        # (C, hidden)
    }


def diffusion_trainer_forward(state, x0_nchw, key):
    """Pallas forward pass: returns the scalar diffusion training loss."""
    B, C, H, W = x0_nchw.shape
    HW = H * W
    hidden = state["w1t"].shape[0]
    time_steps = state["sqrt_alpha_bar"].shape[0]

    # forward-pass randomness (torch.randint / torch.randn_like)
    # TODO(synk): uses JAX PRNG; equivalent distribution, not bit-identical to torch RNG.
    k_t, k_n = jax.random.split(key)
    times = jax.random.randint(k_t, (B,), 0, time_steps)
    noise_nchw = jax.random.normal(k_n, x0_nchw.shape, dtype=jnp.float32)

    sa = state["sqrt_alpha_bar"][times]                  # (B,)
    soma = state["sqrt_one_minus_alpha_bar"][times]      # (B,)

    # sinusoidal time embedding; zero b1 folded in => single per-batch bias column
    half = hidden // 2
    freqs = jnp.exp(-math.log(10000.0) * jnp.arange(half, dtype=jnp.float32) / half)
    ang = times.astype(jnp.float32)[:, None] * freqs[None, :]
    temb = jnp.concatenate([jnp.sin(ang), jnp.cos(ang)], axis=-1)    # (B, hidden)
    bias1 = temb[:, :, None]                                         # (B, hidden, 1)

    # native NCHW order, reshape only: (B, C, HW) keeps HW on the lane axis
    x0 = x0_nchw.reshape(B, C, HW)
    noise = noise_nchw.reshape(B, C, HW)

    kernel = _make_kernel(B, C, HW, hidden)

    def full(shape):
        return pl.BlockSpec(shape, lambda i: (0,) * len(shape))

    smem_vec = pl.BlockSpec((B,), lambda i: (0,), memory_space=pltpu.SMEM)

    loss = pl.pallas_call(
        kernel,
        out_shape=jax.ShapeDtypeStruct((1,), jnp.float32),
        grid_spec=pltpu.PrefetchScalarGridSpec(
            num_scalar_prefetch=0,
            grid=(1,),                          # single step: no per-step grid overhead
            in_specs=[
                smem_vec,                       # sqrt_alpha_bar[times]
                smem_vec,                       # sqrt_one_minus_alpha_bar[times]
                full((B, C, HW)),               # x0
                full((B, C, HW)),               # noise
                full((hidden, C)),              # w1^T (bf16)
                full((C, hidden)),              # w2^T (bf16)
                full((B, hidden, 1)),           # bias1 = b1 + time embedding
            ],
            out_specs=pl.BlockSpec((1,), lambda i: (0,), memory_space=pltpu.SMEM),
        ),
        compiler_params=pltpu.CompilerParams(
            dimension_semantics=("arbitrary",)),
    )(sa, soma, x0, noise, state["w1t"], state["w2t"], bias1)

    return loss[0]


def reference_loss(state, x0_nchw, key):
    """Pure-JAX reference (same RNG, same bf16 matmul casts). Validation only."""
    B, C, H, W = x0_nchw.shape
    HW = H * W
    hidden = state["w1t"].shape[0]
    time_steps = state["sqrt_alpha_bar"].shape[0]

    k_t, k_n = jax.random.split(key)
    times = jax.random.randint(k_t, (B,), 0, time_steps)
    noise = jax.random.normal(k_n, x0_nchw.shape, dtype=jnp.float32)

    sa = state["sqrt_alpha_bar"][times][:, None, None, None]
    soma = state["sqrt_one_minus_alpha_bar"][times][:, None, None, None]
    x_t = (sa * x0_nchw + soma * noise).reshape(B, C, HW)

    half = hidden // 2
    freqs = jnp.exp(-math.log(10000.0) * jnp.arange(half, dtype=jnp.float32) / half)
    ang = times.astype(jnp.float32)[:, None] * freqs[None, :]
    temb = jnp.concatenate([jnp.sin(ang), jnp.cos(ang)], axis=-1)    # (B, hidden)

    h = jnp.einsum("hc,bcp->bhp", state["w1t"], x_t.astype(jnp.bfloat16),
                   preferred_element_type=jnp.float32)
    h = jnp.maximum(h + temb[:, :, None], 0.0)
    pred = jnp.einsum("ch,bhp->bcp", state["w2t"], h.astype(jnp.bfloat16),
                      preferred_element_type=jnp.float32)
    return jnp.mean((pred - noise.reshape(B, C, HW)) ** 2)


if __name__ == "__main__":
    B, C, H, W = 2, 4, 16, 16
    key = jax.random.PRNGKey(0)
    k_x, k_fwd = jax.random.split(key)
    x0 = jax.random.normal(k_x, (B, C, H, W), dtype=jnp.float32)     # NCHW, like PyTorch

    state = make_trainer_state(C, time_steps=1000, hidden=32)

    loss = jax.jit(diffusion_trainer_forward)(state, x0, k_fwd)
    loss = jax.block_until_ready(loss)

    loss_ref = jax.block_until_ready(reference_loss(state, x0, k_fwd))

    assert jnp.allclose(loss, loss_ref, rtol=1e-4, atol=1e-6), (loss, loss_ref)
    print("KERNEL_OK")
</pallas_src>

<mosaic_0001>
module attributes {stable_mosaic.version = 11 : i64} {
  func.func @kernel(%arg0: i32, %arg1: memref<2xf32, #tpu.memory_space<smem>>, %arg2: memref<2xf32, #tpu.memory_space<smem>>, %arg3: memref<2x4x256xf32, #tpu.memory_space<vmem>>, %arg4: memref<2x4x256xf32, #tpu.memory_space<vmem>>, %arg5: memref<32x4xbf16, #tpu.memory_space<vmem>>, %arg6: memref<4x32xbf16, #tpu.memory_space<vmem>>, %arg7: memref<2x32x1xf32, #tpu.memory_space<vmem>>, %arg8: memref<1xf32, #tpu.memory_space<smem>>) attributes {dimension_semantics = [#tpu.dimension_semantics<arbitrary>], iteration_bounds = array<i64: 1>, scalar_prefetch = 0 : i64, scratch_operands = 0 : i64, tpu.core_type = #tpu.core_type<tc>, window_params = [{transform_indices = @transform_0, window_bounds = array<i64: 2>}, {transform_indices = @transform_1, window_bounds = array<i64: 2>}, {pipeline_mode = #tpu.pipeline_mode<synchronous>, transform_indices = @transform_2, window_bounds = array<i64: 2, 4, 256>}, {pipeline_mode = #tpu.pipeline_mode<synchronous>, transform_indices = @transform_3, window_bounds = array<i64: 2, 4, 256>}, {pipeline_mode = #tpu.pipeline_mode<synchronous>, transform_indices = @transform_4, window_bounds = array<i64: 32, 4>}, {pipeline_mode = #tpu.pipeline_mode<synchronous>, transform_indices = @transform_5, window_bounds = array<i64: 4, 32>}, {pipeline_mode = #tpu.pipeline_mode<synchronous>, transform_indices = @transform_6, window_bounds = array<i64: 2, 32, 1>}, {transform_indices = @transform_7, window_bounds = array<i64: 1>}]} {
    %c0 = arith.constant 0 : index
    %0 = memref.load %arg1[%c0] : memref<2xf32, #tpu.memory_space<smem>>
    %c0_0 = arith.constant 0 : index
    %1 = memref.load %arg2[%c0_0] : memref<2xf32, #tpu.memory_space<smem>>
    %c0_1 = arith.constant 0 : index
    %c0_2 = arith.constant 0 : index
    %c0_3 = arith.constant 0 : index
    %2 = vector.load %arg3[%c0_1, %c0_2, %c0_3] : memref<2x4x256xf32, #tpu.memory_space<vmem>>, vector<1x4x256xf32>
    %3 = vector.shape_cast %2 : vector<1x4x256xf32> to vector<4x256xf32>
    %c0_4 = arith.constant 0 : index
    %c0_5 = arith.constant 0 : index
    %c0_6 = arith.constant 0 : index
    %4 = vector.load %arg4[%c0_4, %c0_5, %c0_6] : memref<2x4x256xf32, #tpu.memory_space<vmem>>, vector<1x4x256xf32>
    %5 = vector.shape_cast %4 : vector<1x4x256xf32> to vector<4x256xf32>
    %6 = vector.broadcast %0 : f32 to vector<4x256xf32>
    %7 = arith.mulf %6, %3 : vector<4x256xf32>
    %8 = vector.broadcast %1 : f32 to vector<4x256xf32>
    %9 = arith.mulf %8, %5 : vector<4x256xf32>
    %10 = arith.addf %7, %9 : vector<4x256xf32>
    %c0_7 = arith.constant 0 : index
    %c0_8 = arith.constant 0 : index
    %11 = vector.load %arg5[%c0_7, %c0_8] : memref<32x4xbf16, #tpu.memory_space<vmem>>, vector<32x4xbf16>
    %12 = arith.truncf %10 : vector<4x256xf32> to vector<4x256xbf16>
    %cst = arith.constant dense<0.000000e+00> : vector<32x256xf32>
    %13 = tpu.matmul %11, %12, %cst {dimension_numbers = #tpu.dot_dimension_numbers<[1], [0], [0], [1], [0, 0, 1, 1], [], []>} : vector<32x4xbf16>, vector<4x256xbf16>, vector<32x256xf32> -> vector<32x256xf32>
    %c0_9 = arith.constant 0 : index
    %c0_10 = arith.constant 0 : index
    %c0_11 = arith.constant 0 : index
    %14 = vector.load %arg7[%c0_9, %c0_10, %c0_11] : memref<2x32x1xf32, #tpu.memory_space<vmem>>, vector<1x32x1xf32>
    %15 = vector.shape_cast %14 : vector<1x32x1xf32> to vector<32x1xf32>
    %16 = vector.broadcast %15 : vector<32x1xf32> to vector<32x256xf32>
    %17 = arith.addf %13, %16 : vector<32x256xf32>
    %cst_12 = arith.constant 0.000000e+00 : f32
    %18 = vector.broadcast %cst_12 : f32 to vector<32x256xf32>
    %19 = arith.maximumf %17, %18 : vector<32x256xf32>
    %c0_13 = arith.constant 0 : index
    %c0_14 = arith.constant 0 : index
    %20 = vector.load %arg6[%c0_13, %c0_14] : memref<4x32xbf16, #tpu.memory_space<vmem>>, vector<4x32xbf16>
    %21 = arith.truncf %19 : vector<32x256xf32> to vector<32x256xbf16>
    %cst_15 = arith.constant dense<0.000000e+00> : vector<4x256xf32>
    %22 = tpu.matmul %20, %21, %cst_15 {dimension_numbers = #tpu.dot_dimension_numbers<[1], [0], [0], [1], [0, 0, 1, 1], [], []>} : vector<4x32xbf16>, vector<32x256xbf16>, vector<4x256xf32> -> vector<4x256xf32>
    %23 = arith.subf %22, %5 : vector<4x256xf32>
    %24 = arith.mulf %23, %23 : vector<4x256xf32>
    %25 = vector.shape_cast %24 : vector<4x256xf32> to vector<1x4x256xf32>
    %cst_16 = arith.constant dense<0.000000e+00> : vector<1xf32>
    %26 = vector.multi_reduction <add>, %25, %cst_16 [1, 2] : vector<1x4x256xf32> to vector<1xf32>
    %27 = vector.shape_cast %26 : vector<1xf32> to vector<1x1x1xf32>
    %28 = vector.extract %27[0, 0, 0] : f32 from vector<1x1x1xf32>
    %cst_17 = arith.constant 0.000000e+00 : f32
    %29 = arith.addf %cst_17, %28 : f32
    %c1 = arith.constant 1 : index
    %30 = memref.load %arg1[%c1] : memref<2xf32, #tpu.memory_space<smem>>
    %c1_18 = arith.constant 1 : index
    %31 = memref.load %arg2[%c1_18] : memref<2xf32, #tpu.memory_space<smem>>
    %c1_19 = arith.constant 1 : index
    %c0_20 = arith.constant 0 : index
    %c0_21 = arith.constant 0 : index
    %32 = vector.load %arg3[%c1_19, %c0_20, %c0_21] : memref<2x4x256xf32, #tpu.memory_space<vmem>>, vector<1x4x256xf32>
    %33 = vector.shape_cast %32 : vector<1x4x256xf32> to vector<4x256xf32>
    %c1_22 = arith.constant 1 : index
    %c0_23 = arith.constant 0 : index
    %c0_24 = arith.constant 0 : index
    %34 = vector.load %arg4[%c1_22, %c0_23, %c0_24] : memref<2x4x256xf32, #tpu.memory_space<vmem>>, vector<1x4x256xf32>
    %35 = vector.shape_cast %34 : vector<1x4x256xf32> to vector<4x256xf32>
    %36 = vector.broadcast %30 : f32 to vector<4x256xf32>
    %37 = arith.mulf %36, %33 : vector<4x256xf32>
    %38 = vector.broadcast %31 : f32 to vector<4x256xf32>
    %39 = arith.mulf %38, %35 : vector<4x256xf32>
    %40 = arith.addf %37, %39 : vector<4x256xf32>
    %c0_25 = arith.constant 0 : index
    %c0_26 = arith.constant 0 : index
    %41 = vector.load %arg5[%c0_25, %c0_26] : memref<32x4xbf16, #tpu.memory_space<vmem>>, vector<32x4xbf16>
    %42 = arith.truncf %40 : vector<4x256xf32> to vector<4x256xbf16>
    %cst_27 = arith.constant dense<0.000000e+00> : vector<32x256xf32>
    %43 = tpu.matmul %41, %42, %cst_27 {dimension_numbers = #tpu.dot_dimension_numbers<[1], [0], [0], [1], [0, 0, 1, 1], [], []>} : vector<32x4xbf16>, vector<4x256xbf16>, vector<32x256xf32> -> vector<32x256xf32>
    %c1_28 = arith.constant 1 : index
    %c0_29 = arith.constant 0 : index
    %c0_30 = arith.constant 0 : index
    %44 = vector.load %arg7[%c1_28, %c0_29, %c0_30] : memref<2x32x1xf32, #tpu.memory_space<vmem>>, vector<1x32x1xf32>
    %45 = vector.shape_cast %44 : vector<1x32x1xf32> to vector<32x1xf32>
    %46 = vector.broadcast %45 : vector<32x1xf32> to vector<32x256xf32>
    %47 = arith.addf %43, %46 : vector<32x256xf32>
    %cst_31 = arith.constant 0.000000e+00 : f32
    %48 = vector.broadcast %cst_31 : f32 to vector<32x256xf32>
    %49 = arith.maximumf %47, %48 : vector<32x256xf32>
    %c0_32 = arith.constant 0 : index
    %c0_33 = arith.constant 0 : index
    %50 = vector.load %arg6[%c0_32, %c0_33] : memref<4x32xbf16, #tpu.memory_space<vmem>>, vector<4x32xbf16>
    %51 = arith.truncf %49 : vector<32x256xf32> to vector<32x256xbf16>
    %cst_34 = arith.constant dense<0.000000e+00> : vector<4x256xf32>
    %52 = tpu.matmul %50, %51, %cst_34 {dimension_numbers = #tpu.dot_dimension_numbers<[1], [0], [0], [1], [0, 0, 1, 1], [], []>} : vector<4x32xbf16>, vector<32x256xbf16>, vector<4x256xf32> -> vector<4x256xf32>
    %53 = arith.subf %52, %35 : vector<4x256xf32>
    %54 = arith.mulf %53, %53 : vector<4x256xf32>
    %55 = vector.shape_cast %54 : vector<4x256xf32> to vector<1x4x256xf32>
    %cst_35 = arith.constant dense<0.000000e+00> : vector<1xf32>
    %56 = vector.multi_reduction <add>, %55, %cst_35 [1, 2] : vector<1x4x256xf32> to vector<1xf32>
    %57 = vector.shape_cast %56 : vector<1xf32> to vector<1x1x1xf32>
    %58 = vector.extract %57[0, 0, 0] : f32 from vector<1x1x1xf32>
    %59 = arith.addf %29, %58 : f32
    %cst_36 = arith.constant 4.8828125E-4 : f32
    %60 = arith.mulf %59, %cst_36 : f32
    %c0_37 = arith.constant 0 : index
    %61 = memref.load %arg8[%c0_37] : memref<1xf32, #tpu.memory_space<smem>>
    memref.store %60, %arg8[%c0_37] : memref<1xf32, #tpu.memory_space<smem>>
    return
  }
  func.func @transform_0(%arg0: i32) -> i32 {
    %c0_i32 = arith.constant 0 : i32
    %c0_i32_0 = arith.constant 0 : i32
    return %c0_i32 : i32
  }
  func.func @transform_1(%arg0: i32) -> i32 {
    %c0_i32 = arith.constant 0 : i32
    %c0_i32_0 = arith.constant 0 : i32
    return %c0_i32 : i32
  }
  func.func @transform_2(%arg0: i32) -> (i32, i32, i32) {
    %c0_i32 = arith.constant 0 : i32
    %c0_i32_0 = arith.constant 0 : i32
    %c0_i32_1 = arith.constant 0 : i32
    %c0_i32_2 = arith.constant 0 : i32
    return %c0_i32, %c0_i32_0, %c0_i32_1 : i32, i32, i32
  }
  func.func @transform_3(%arg0: i32) -> (i32, i32, i32) {
    %c0_i32 = arith.constant 0 : i32
    %c0_i32_0 = arith.constant 0 : i32
    %c0_i32_1 = arith.constant 0 : i32
    %c0_i32_2 = arith.constant 0 : i32
    return %c0_i32, %c0_i32_0, %c0_i32_1 : i32, i32, i32
  }
  func.func @transform_4(%arg0: i32) -> (i32, i32) {
    %c0_i32 = arith.constant 0 : i32
    %c0_i32_0 = arith.constant 0 : i32
    %c0_i32_1 = arith.constant 0 : i32
    return %c0_i32, %c0_i32_0 : i32, i32
  }
  func.func @transform_5(%arg0: i32) -> (i32, i32) {
    %c0_i32 = arith.constant 0 : i32
    %c0_i32_0 = arith.constant 0 : i32
    %c0_i32_1 = arith.constant 0 : i32
    return %c0_i32, %c0_i32_0 : i32, i32
  }
  func.func @transform_6(%arg0: i32) -> (i32, i32, i32) {
    %c0_i32 = arith.constant 0 : i32
    %c0_i32_0 = arith.constant 0 : i32
    %c0_i32_1 = arith.constant 0 : i32
    %c0_i32_2 = arith.constant 0 : i32
    return %c0_i32, %c0_i32_0, %c0_i32_1 : i32, i32, i32
  }
  func.func @transform_7(%arg0: i32) -> i32 {
    %c0_i32 = arith.constant 0 : i32
    %c0_i32_0 = arith.constant 0 : i32
    return %c0_i32 : i32
  }
}

</mosaic_0001>

<llo_original>
// kernel: diffusion_trainer_forward.21
$region0: #{diffusion_trainer_forward.21}
  #allocation0 [shape = 'u32[]', space=smem, size = 0x4, offset = 0x4, fixed_abs, tag = 'smem constant byte address 0x4 - core index']
  #allocation1 [shape = 'u32[72,128]{1,0:T(1,128)}', space=vmem, size = 0x9000, scoped, tag = 'internal scratch']
  %s0 = inlined_call_operand.vmem [shape: f32[2], index: 0, kind: input, shape index: {}]
  %s1 = inlined_call_operand.vmem [shape: f32[2], index: 1, kind: input, shape index: {}]
  %s2 = inlined_call_operand.vmem [shape: f32[2,4,256], index: 2, kind: input, shape index: {}]
  %s3 = inlined_call_operand.vmem [shape: f32[2,4,256], index: 3, kind: input, shape index: {}]
  %s4 = inlined_call_operand.vmem [shape: bf16[32,4], index: 4, kind: input, shape index: {}]
  %s5 = inlined_call_operand.vmem [shape: bf16[4,32], index: 5, kind: input, shape index: {}]
  %s6 = inlined_call_operand.vmem [shape: f32[2,32,1], index: 6, kind: input, shape index: {}]
  %s7 = inlined_call_operand.hbm [shape: f32[1], index: 7, kind: output, shape index: {}]
  %s8 = sld [smem:[#allocation0]]
  $region46: #{diffusion_trainer_forward.21} parent=0
    _
  %s10 = ssub.s32 1, %s8
  %s11 = scalar_select 0, %s10, %s8
  $region1: #{diffusion_trainer_forward.21} parent=0
    #allocation2 [shape = 'u8[512]{0}', space=smem, size = 0x200, scoped, tag = 'input window, operand 0, single buffered']
    #allocation3 [shape = 's32[1]{0}', space=sflag, size = 0x4, scoped, tag = 'scoped memory for diffusion_trainer_forward.21']
    #allocation4 [shape = 's32[1]{0}', space=sflag, size = 0x4, scoped, tag = 'scoped memory for diffusion_trainer_forward.21']
    #allocation5 [shape = 'u8[512]{0}', space=smem, size = 0x200, scoped, tag = 'input window, operand 1, single buffered']
    #allocation6 [shape = 's32[1]{0}', space=sflag, size = 0x4, scoped, tag = 'scoped memory for diffusion_trainer_forward.21']
    #allocation7 [shape = 'u8[512]{0}', space=smem, size = 0x200, scoped, tag = 'output window, operand 0, single buffered']
    %12 = vsyncpa [#allocation4], 0
    %13 = vsyncpa [#allocation6], 0
    %14 = vsyncpa [#allocation3], 0
    // Predicated region
    $region2: #{diffusion_trainer_forward.21} parent=1 // pred_check
      _
    $region3: #{diffusion_trainer_forward.21} parent=1 // pred_check_branch
      %16 = sbr.rel (0) target = $region5
    $region4: #{diffusion_trainer_forward.21} parent=1 // pred_region
      %18 = vsyncadd [#allocation4], 0
      %s20 = sshll.u32 %s0, 4
      %s21 = int_to_ptr.vmem [resolvable:$true] %s20
      %23 = dma.vmem_to_smem %s21, 16, [#allocation2], [#allocation4]
    $region5: #{diffusion_trainer_forward.21} parent=1 // pred_fallthru
      _
    // Predicated region
    $region6: #{diffusion_trainer_forward.21} parent=1 // pred_check
      _
    $region7: #{diffusion_trainer_forward.21} parent=1 // pred_check_branch
      %25 = sbr.rel (0) target = $region9
    $region8: #{diffusion_trainer_forward.21} parent=1 // pred_region
      %27 = vsyncadd [#allocation6], 0
      %s29 = sshll.u32 %s1, 4
      %s30 = int_to_ptr.vmem [resolvable:$true] %s29
      %32 = dma.vmem_to_smem %s30, 16, [#allocation5], [#allocation6]
    $region9: #{diffusion_trainer_forward.21} parent=1 // pred_fallthru
      _
    // Predicated region
    $region10: #{diffusion_trainer_forward.21} parent=1 // pred_check
      _
    $region11: #{diffusion_trainer_forward.21} parent=1 // pred_check_branch
      %34 = sbr.rel (0) target = $region13
    $region12: #{diffusion_trainer_forward.21} parent=1 // pred_region
      _
    $region13: #{diffusion_trainer_forward.21} parent=1 // pred_fallthru
      _
    // Predicated region
    $region14: #{diffusion_trainer_forward.21} parent=1 // pred_check
      _
    $region15: #{diffusion_trainer_forward.21} parent=1 // pred_check_branch
      %36 = sbr.rel (0) target = $region17
    $region16: #{diffusion_trainer_forward.21} parent=1 // pred_region
      _
    $region17: #{diffusion_trainer_forward.21} parent=1 // pred_fallthru
      _
    // Predicated region
    $region18: #{diffusion_trainer_forward.21} parent=1 // pred_check
      _
    $region19: #{diffusion_trainer_forward.21} parent=1 // pred_check_branch
      %38 = sbr.rel (0) target = $region21
    $region20: #{diffusion_trainer_forward.21} parent=1 // pred_region
      _
    $region21: #{diffusion_trainer_forward.21} parent=1 // pred_fallthru
      _
    // Predicated region
    $region22: #{diffusion_trainer_forward.21} parent=1 // pred_check
      _
    $region23: #{diffusion_trainer_forward.21} parent=1 // pred_check_branch
      %40 = sbr.rel (0) target = $region25
    $region24: #{diffusion_trainer_forward.21} parent=1 // pred_region
      _
    $region25: #{diffusion_trainer_forward.21} parent=1 // pred_fallthru
      _
    // Predicated region
    $region26: #{diffusion_trainer_forward.21} parent=1 // pred_check
      _
    $region27: #{diffusion_trainer_forward.21} parent=1 // pred_check_branch
      %42 = sbr.rel (0) target = $region29
    $region28: #{diffusion_trainer_forward.21} parent=1 // pred_region
      _
    $region29: #{diffusion_trainer_forward.21} parent=1 // pred_fallthru
      _
    // Predicated region
    $region30: #{diffusion_trainer_forward.21} parent=1 // pred_check
      _
    $region31: #{diffusion_trainer_forward.21} parent=1 // pred_check_branch
      %44 = sbr.rel (0) target = $region33
    $region32: #{diffusion_trainer_forward.21} parent=1 // pred_region
      %46 = dma.done [#allocation4], 16
    $region33: #{diffusion_trainer_forward.21} parent=1 // pred_fallthru
      _
    // Predicated region
    $region34: #{diffusion_trainer_forward.21} parent=1 // pred_check
      _
    $region35: #{diffusion_trainer_forward.21} parent=1 // pred_check_branch
      %48 = sbr.rel (0) target = $region37
    $region36: #{diffusion_trainer_forward.21} parent=1 // pred_region
      %50 = dma.done [#allocation6], 16
    $region37: #{diffusion_trainer_forward.21} parent=1 // pred_fallthru
      _
    %51 = sfence
    %s53 = sld [smem:[#allocation2]]
    %s54 = sld [smem:[#allocation5]]
    %v55 = vld [vmem:[%s2] sm:$0xff]
    %v56 = vld [vmem:[%s3] sm:$0xff]
    %v57 = vstv %s53
    %v58 = vmul.f32 %v57, %v55
    %v59 = vstv %s54
    %v60 = vmul.f32 %v59, %v56
    %v61 = vadd.f32 %v58, %v60
    %v62 = vld [vmem:[%s4] sm:$0xf]
    %v63 = vld [vmem:[%s4 + $0x4] sm:$0xf]
    %v64 = vld [vmem:[%s4 + $0x8] sm:$0xf]
    %v65 = vld [vmem:[%s4 + $0xc] sm:$0xf]
    %67 = vst [vmem:[#allocation1] ss:$2 sm:$0xff] %v61
    %v68 = vld.sshfl [vmem:[#allocation1] sm:$0xff pattern:$0x75316420]
    %v69 = vld.sshfl [vmem:[#allocation1 + $0x8] sm:$0xff pattern:$0x75316420]
    %v72 = vpack.c.bf16 %v68, %v68
    %v73 = vpack.c.bf16 %v69, %v69
    %v74 = vld [vmem:[%s6] sm:$0xff]
    %v75 = vld [vmem:[%s6 + $0x8] sm:$0xff]
    %v76 = vld [vmem:[%s6 + $0x10] sm:$0xff]
    %v77 = vld [vmem:[%s6 + $0x18] sm:$0xff]
    %79 = vset.pattern.permute.xlu0 0
    %80 = vperm.xlu0 %79, %v74
    %v81 = vpop.permute.xlu0 %80
    %84 = vset.pattern.permute.xlu0 0
    %85 = vperm.xlu0 %84, %v75
    %v86 = vpop.permute.xlu0 %85
    %89 = vset.pattern.permute.xlu0 0
    %90 = vperm.xlu0 %89, %v76
    %v91 = vpop.permute.xlu0 %90
    %94 = vset.pattern.permute.xlu0 0
    %95 = vperm.xlu0 %94, %v77
    %v96 = vpop.permute.xlu0 %95
    %v102 = vunpack.c.l.b16 %v62
    %v103 = vunpack.c.l.b16 %v63
    %v104 = vunpack.c.l.b16 %v64
    %v105 = vunpack.c.l.b16 %v65
    %v106 = vpack.c.b16 %v103, %v102
    %v107 = vpack.c.b16 %v105, %v104
    %vm108 = vcmask 31744
    %v110 = vsel %vm108, %v106, 0
    %v113 = vsel %vm108, %v107, 0
    %vm115 = vcmask 1041408
    %v117 = vsel %vm115, %v72, 0
    %v120 = vsel %vm115, %v73, 0
    %122 = vmatpush.bf16.msra.mxu0 0
    %123 = vmatpush.bf16.msra.mxu0 0
    %124 = vmatpush.bf16.msra.mxu0 0
    %125 = vmatpush.bf16.msra.mxu0 0
    %126 = vmatpush.bf16.msra.mxu0 0
    %127 = vmatpush.bf16.msra.mxu0 0
    %128 = vmatpush.bf16.msra.mxu0 0
    %129 = vmatpush.bf16.msra.mxu0 %v117
    %130 = vmatmul.bf16.gmra.mxu0 %v110
    %v131 = vpop.f32.mrf.mxu0
    %v132 = vadd.f32 %v81, %v131
    %v133 = vpop.f32.mrf.mxu0
    %v134 = vadd.f32 %v86, %v133
    %135 = vmatmul.bf16.gmra.mxu0 %v113
    %v136 = vpop.f32.mrf.mxu0
    %v137 = vadd.f32 %v91, %v136
    %v138 = vpop.f32.mrf.mxu0
    %v139 = vadd.f32 %v96, %v138
    %140 = vdwg.mxu0
    %141 = vmatpush.bf16.msra.mxu0 0
    %142 = vmatpush.bf16.msra.mxu0 0
    %143 = vmatpush.bf16.msra.mxu0 0
    %144 = vmatpush.bf16.msra.mxu0 0
    %145 = vmatpush.bf16.msra.mxu0 0
    %146 = vmatpush.bf16.msra.mxu0 0
    %147 = vmatpush.bf16.msra.mxu0 0
    %148 = vmatpush.bf16.msra.mxu0 %v120
    %149 = vmatmul.bf16.gmra.mxu0 %v110
    %v150 = vpop.f32.mrf.mxu0
    %v151 = vadd.f32 %v81, %v150
    %v152 = vpop.f32.mrf.mxu0
    %v153 = vadd.f32 %v86, %v152
    %154 = vmatmul.bf16.gmra.mxu0 %v113
    %v155 = vpop.f32.mrf.mxu0
    %v156 = vadd.f32 %v91, %v155
    %v157 = vpop.f32.mrf.mxu0
    %v158 = vadd.f32 %v96, %v157
    %159 = vdwg.mxu0
    %v160 = vmax.f32 %v132, 0.0
    %v161 = vmax.f32 %v151, 0.0
    %v162 = vmax.f32 %v134, 0.0
    %v163 = vmax.f32 %v153, 0.0
    %v164 = vmax.f32 %v137, 0.0
    %v165 = vmax.f32 %v156, 0.0
    %v166 = vmax.f32 %v139, 0.0
    %v167 = vmax.f32 %v158, 0.0
    %v168 = vld [vmem:[%s5] sm:$0x3]
    %v169 = vpack.c.bf16 %v162, %v160
    %v170 = vpack.c.bf16 %v163, %v161
    %v171 = vpack.c.bf16 %v166, %v164
    %v172 = vpack.c.bf16 %v167, %v165
    %vm173 = vcmask 261120
    %v175 = vsel %vm173, %v168, 0
    %177 = vmatpush.bf16.msra.mxu0 0
    %178 = vmatpush.bf16.msra.mxu0 0
    %179 = vmatpush.bf16.msra.mxu0 0
    %180 = vmatpush.bf16.msra.mxu0 0
    %181 = vmatpush.bf16.msra.mxu0 0
    %182 = vmatpush.bf16.msra.mxu0 0
    %183 = vmatpush.bf16.msra.mxu0 %v171
    %184 = vmatpush.bf16.msra.mxu0 %v169
    %185 = vmatmul.bf16.gmra.mxu0 %v175
    %v186 = vpop.f32.mrf.mxu0
    %v187 = vadd.f32 0.0, %v186
    %v188 = vpop.f32.mrf.mxu0
    %189 = vdwg.mxu0
    %190 = vmatpush.bf16.msra.mxu0 0
    %191 = vmatpush.bf16.msra.mxu0 0
    %192 = vmatpush.bf16.msra.mxu0 0
    %193 = vmatpush.bf16.msra.mxu0 0
    %194 = vmatpush.bf16.msra.mxu0 0
    %195 = vmatpush.bf16.msra.mxu0 0
    %196 = vmatpush.bf16.msra.mxu0 %v172
    %197 = vmatpush.bf16.msra.mxu0 %v170
    %198 = vmatmul.bf16.gmra.mxu0 %v175
    %v199 = vpop.f32.mrf.mxu0
    %v200 = vadd.f32 0.0, %v199
    %v201 = vpop.f32.mrf.mxu0
    %202 = vdwg.mxu0
    %204 = vst [vmem:[#allocation1] ss:$2 sm:$0xff] %v56
    %v205 = vld.sshfl [vmem:[#allocation1] sm:$0xff pattern:$0x75316420]
    %v206 = vld.sshfl [vmem:[#allocation1 + $0x8] sm:$0xff pattern:$0x75316420]
    %v209 = vsub.f32 %v187, %v205
    %v210 = vsub.f32 %v200, %v206
    %v211 = vmul.f32 %v209, %v209
    %v212 = vmul.f32 %v210, %v210
    %vm213 = vcmask 1043456
    %v214 = vsel %vm213, %v211, 0.0
    %v215 = vsel %vm213, %v212, 0.0
    %v216 = vadd.f32 %v214, %v215
    %217 = vadd.xlane.f32.xlu0 %v216
    %v218 = vpop.xlane.xlu0 %217
    %v219 = vrot.slane %v218, 4
    %v220 = vadd.f32 %v218, %v219
    %v221 = vrot.slane %v220, 2
    %v222 = vadd.f32 %v220, %v221
    %v223 = vrot.slane %v222, 1
    %v224 = vadd.f32 %v222, %v223
    %s225 = vtos %v224
    %s226 = sadd.f32 %s225, 0.0
    %s227 = sld [smem:[#allocation2 + $0x1]]
    %s228 = sld [smem:[#allocation5 + $0x1]]
    %s229 = scalar_lea.vmem %s2, 8
    %v230 = vld [vmem:[%s229] sm:$0xff]
    %s231 = scalar_lea.vmem %s3, 8
    %v232 = vld [vmem:[%s231] sm:$0xff]
    %v233 = vstv %s227
    %v234 = vmul.f32 %v233, %v230
    %v235 = vstv %s228
    %v236 = vmul.f32 %v235, %v232
    %v237 = vadd.f32 %v234, %v236
    %239 = vst [vmem:[#allocation1] ss:$2 sm:$0xff] %v237
    %v240 = vld.sshfl [vmem:[#allocation1] sm:$0xff pattern:$0x75316420]
    %v241 = vld.sshfl [vmem:[#allocation1 + $0x8] sm:$0xff pattern:$0x75316420]
    %v244 = vpack.c.bf16 %v240, %v240
    %v245 = vpack.c.bf16 %v241, %v241
    %s246 = scalar_lea.vmem %s6, 32
    %v247 = vld [vmem:[%s246] sm:$0xff]
    %v248 = vld [vmem:[%s246 + $0x8] sm:$0xff]
    %v249 = vld [vmem:[%s246 + $0x10] sm:$0xff]
    %v250 = vld [vmem:[%s246 + $0x18] sm:$0xff]
    %252 = vset.pattern.permute.xlu0 0
    %253 = vperm.xlu0 %252, %v247
    %v254 = vpop.permute.xlu0 %253
    %257 = vset.pattern.permute.xlu0 0
    %258 = vperm.xlu0 %257, %v248
    %v259 = vpop.permute.xlu0 %258
    %262 = vset.pattern.permute.xlu0 0
    %263 = vperm.xlu0 %262, %v249
    %v264 = vpop.permute.xlu0 %263
    %267 = vset.pattern.permute.xlu0 0
    %268 = vperm.xlu0 %267, %v250
    %v269 = vpop.permute.xlu0 %268
    %v272 = vsel %vm115, %v244, 0
    %v275 = vsel %vm115, %v245, 0
    %277 = vmatpush.bf16.msra.mxu0 0
    %278 = vmatpush.bf16.msra.mxu0 0
    %279 = vmatpush.bf16.msra.mxu0 0
    %280 = vmatpush.bf16.msra.mxu0 0
    %281 = vmatpush.bf16.msra.mxu0 0
    %282 = vmatpush.bf16.msra.mxu0 0
    %283 = vmatpush.bf16.msra.mxu0 0
    %284 = vmatpush.bf16.msra.mxu0 %v272
    %285 = vmatmul.bf16.gmra.mxu0 %v110
    %v286 = vpop.f32.mrf.mxu0
    %v287 = vadd.f32 %v254, %v286
    %v288 = vpop.f32.mrf.mxu0
    %v289 = vadd.f32 %v259, %v288
    %290 = vmatmul.bf16.gmra.mxu0 %v113
    %v291 = vpop.f32.mrf.mxu0
    %v292 = vadd.f32 %v264, %v291
    %v293 = vpop.f32.mrf.mxu0
    %v294 = vadd.f32 %v269, %v293
    %295 = vdwg.mxu0
    %296 = vmatpush.bf16.msra.mxu0 0
    %297 = vmatpush.bf16.msra.mxu0 0
    %298 = vmatpush.bf16.msra.mxu0 0
    %299 = vmatpush.bf16.msra.mxu0 0
    %300 = vmatpush.bf16.msra.mxu0 0
    %301 = vmatpush.bf16.msra.mxu0 0
    %302 = vmatpush.bf16.msra.mxu0 0
    %303 = vmatpush.bf16.msra.mxu0 %v275
    %304 = vmatmul.bf16.gmra.mxu0 %v110
    %v305 = vpop.f32.mrf.mxu0
    %v306 = vadd.f32 %v254, %v305
    %v307 = vpop.f32.mrf.mxu0
    %v308 = vadd.f32 %v259, %v307
    %309 = vmatmul.bf16.gmra.mxu0 %v113
    %v310 = vpop.f32.mrf.mxu0
    %v311 = vadd.f32 %v264, %v310
    %v312 = vpop.f32.mrf.mxu0
    %v313 = vadd.f32 %v269, %v312
    %314 = vdwg.mxu0
    %v315 = vmax.f32 %v287, 0.0
    %v316 = vmax.f32 %v306, 0.0
    %v317 = vmax.f32 %v289, 0.0
    %v318 = vmax.f32 %v308, 0.0
    %v319 = vmax.f32 %v292, 0.0
    %v320 = vmax.f32 %v311, 0.0
    %v321 = vmax.f32 %v294, 0.0
    %v322 = vmax.f32 %v313, 0.0
    %v323 = vpack.c.bf16 %v317, %v315
    %v324 = vpack.c.bf16 %v318, %v316
    %v325 = vpack.c.bf16 %v321, %v319
    %v326 = vpack.c.bf16 %v322, %v320
    %327 = vmatpush.bf16.msra.mxu0 0
    %328 = vmatpush.bf16.msra.mxu0 0
    %329 = vmatpush.bf16.msra.mxu0 0
    %330 = vmatpush.bf16.msra.mxu0 0
    %331 = vmatpush.bf16.msra.mxu0 0
    %332 = vmatpush.bf16.msra.mxu0 0
    %333 = vmatpush.bf16.msra.mxu0 %v325
    %334 = vmatpush.bf16.msra.mxu0 %v323
    %335 = vmatmul.bf16.gmra.mxu0 %v175
    %v336 = vpop.f32.mrf.mxu0
    %v337 = vadd.f32 0.0, %v336
    %v338 = vpop.f32.mrf.mxu0
    %339 = vdwg.mxu0
    %340 = vmatpush.bf16.msra.mxu0 0
    %341 = vmatpush.bf16.msra.mxu0 0
    %342 = vmatpush.bf16.msra.mxu0 0
    %343 = vmatpush.bf16.msra.mxu0 0
    %344 = vmatpush.bf16.msra.mxu0 0
    %345 = vmatpush.bf16.msra.mxu0 0
    %346 = vmatpush.bf16.msra.mxu0 %v326
    %347 = vmatpush.bf16.msra.mxu0 %v324
    %348 = vmatmul.bf16.gmra.mxu0 %v175
    %v349 = vpop.f32.mrf.mxu0
    %v350 = vadd.f32 0.0, %v349
    %v351 = vpop.f32.mrf.mxu0
    %352 = vdwg.mxu0
    %354 = vst [vmem:[#allocation1] ss:$2 sm:$0xff] %v232
    %v355 = vld.sshfl [vmem:[#allocation1] sm:$0xff pattern:$0x75316420]
    %v356 = vld.sshfl [vmem:[#allocation1 + $0x8] sm:$0xff pattern:$0x75316420]
    %v359 = vsub.f32 %v337, %v355
    %v360 = vsub.f32 %v350, %v356
    %v361 = vmul.f32 %v359, %v359
    %v362 = vmul.f32 %v360, %v360
    %v363 = vsel %vm213, %v361, 0.0
    %v364 = vsel %vm213, %v362, 0.0
    %v365 = vadd.f32 %v363, %v364
    %366 = vadd.xlane.f32.xlu0 %v365
    %v367 = vpop.xlane.xlu0 %366
    %v368 = vrot.slane %v367, 4
    %v369 = vadd.f32 %v367, %v368
    %v370 = vrot.slane %v369, 2
    %v371 = vadd.f32 %v369, %v370
    %v372 = vrot.slane %v371, 1
    %v373 = vadd.f32 %v371, %v372
    %s374 = vtos %v373
    %s375 = sadd.f32 %s226, %s374
    %s376 = smul.f32 %s375, 0.00048828125
    %s377 = scalar_lea.smem [#allocation7], 0
    %378 = sst [smem:[%s377]] %s376
    // Predicated region
    $region38: #{diffusion_trainer_forward.21} parent=1 // pred_check
      _
    $region39: #{diffusion_trainer_forward.21} parent=1 // pred_check_branch
      %380 = sbr.rel (0) target = $region41
    $region40: #{diffusion_trainer_forward.21} parent=1 // pred_region
      %382 = vsyncadd [#allocation3], 0
      %s384 = sshll.u32 %s7, 4
      %s385 = int_to_ptr.hbm [resolvable:$true] %s384
      %387 = dma.smem_to_hbm [#allocation7], 16, %s385, [#allocation3]
    $region41: #{diffusion_trainer_forward.21} parent=1 // pred_fallthru
      _
    // Predicated region
    $region42: #{diffusion_trainer_forward.21} parent=1 // pred_check
      _
    $region43: #{diffusion_trainer_forward.21} parent=1 // pred_check_branch
      %389 = sbr.rel (0) target = $region45
    $region44: #{diffusion_trainer_forward.21} parent=1 // pred_region
      %391 = dma.done [#allocation3], 16
    $region45: #{diffusion_trainer_forward.21} parent=1 // pred_fallthru
      _
    %392 = sfence
    %393 = vsyncpa [#allocation3], 1
    %394 = vsyncpa [#allocation4], 1
    %395 = vsyncpa [#allocation6], 1

</llo_original>
